<compile_context>
chip_gen: v7x
topology: tpu7x:2x2x1
jax: 0.10.0
libtpu: 0.0.40
codegen_flags: <defaults>
</compile_context>

<pallas_src>
import jax
import jax.numpy as jnp
from jax.experimental import pallas as pl
from jax.experimental.pallas import tpu as pltpu


def _round_up(n: int, m: int) -> int:
    return ((n + m - 1) // m) * m


def _cdiv(a: int, b: int) -> int:
    return -(-a // b)


def _vmem_budget_cap() -> int:
    """Usable VMEM budget for this kernel, generation-aware."""
    try:
        cap = int(pltpu.get_tpu_info().vmem_capacity_bytes)
    except Exception:
        cap = 128 << 20
    # Leave headroom for Mosaic-internal scratch / pipeline bookkeeping:
    # ~40 MiB usable on v7x (64 MiB physical), ~104 MiB on v5e/v6e (128 MiB).
    return max(cap - (24 << 20), 16 << 20)


def _sigmoid_dtype(compute_dtype):
    """bf16 sigmoid on v6e/v7x (bf16 EUP); f32 on v5e (no bf16 EUP/VPU)."""
    try:
        kind = jax.devices()[0].device_kind.lower()
    except Exception:
        return jnp.float32
    if ("v5 lite" in kind) or ("v5e" in kind) or ("v5litepod" in kind):
        return jnp.float32
    return compute_dtype


def _resident_spec(shape):
    """Constant-index (grid-resident) BlockSpec, single-buffered."""
    index_map = lambda i, _n=len(shape): (0,) * _n
    if hasattr(pl, "Buffered"):
        try:
            return pl.BlockSpec(shape, index_map, pipeline_mode=pl.Buffered(1))
        except TypeError:
            pass
    return pl.BlockSpec(shape, index_map)


def _make_kernel(C: int, R: int, Cp: int, with_intervention: bool,
                 compute_dtype, act_dtype):
    """Build the kernel body.

    C, R are the true (unpadded) concept / residual dims; Cp is the padded
    concept dim (multiple of 128) used as the lane-aligned split point inside
    the fused [Wc | Wr] matmul output.
    """

    def kernel(*refs):
        if with_intervention:
            (x_ref, concepts_ref, iv_ref,
             wcr_ref, bcr_ref, wtc_ref, wtr_ref, bt_ref,
             cl_ref, res_ref, tl_ref) = refs
        else:
            (x_ref,
             wcr_ref, bcr_ref, wtc_ref, wtr_ref, bt_ref,
             cl_ref, res_ref, tl_ref) = refs

        # In-kernel cast: x travels HBM->VMEM in its native dtype; the VPU cast
        # hides under the MXU.
        x = x_ref[...].astype(compute_dtype)                     # (TB, D)

        # Fused concept+residual linear: one MXU push over [Wc | 0 | Wr | 0].
        cr = jnp.dot(x, wcr_ref[...],
                     preferred_element_type=jnp.float32) + bcr_ref[...]
        concept_logits = cr[:, :C]          # prefix slice -> no lane shift
        residual = cr[:, Cp:Cp + R]         # starts on a 128-lane boundary

        # 'binary' concept predictions (+ optional intervention mixing).
        concept_preds = jax.nn.sigmoid(concept_logits.astype(act_dtype))
        if with_intervention:
            iv = iv_ref[...].astype(jnp.float32)
            cgt = concepts_ref[...].astype(jnp.float32)
            concept_preds = (concept_preds.astype(jnp.float32) * (1.0 - iv)
                             + cgt * iv)

        # concat([concept_preds, residual], -1) @ Wt  ==  split matmul over
        # [Wt_c; Wt_r] (mathematically identical, avoids an in-kernel concat).
        target_logits = (
            jnp.dot(concept_preds.astype(compute_dtype), wtc_ref[...],
                    preferred_element_type=jnp.float32)
            + jnp.dot(residual.astype(compute_dtype), wtr_ref[...],
                      preferred_element_type=jnp.float32)
            + bt_ref[...]
        )

        cl_ref[...] = concept_logits
        res_ref[...] = residual
        tl_ref[...] = target_logits

    return kernel


def prepare_params(params, compute_dtype=jnp.bfloat16):
    """One-time weight packing (hoisted out of the per-call forward)."""
    Wc, bc = params["Wc"], params["bc"]
    Wr, br = params["Wr"], params["br"]
    Wt, bt = params["Wt"], params["bt"]
    D, C = Wc.shape
    R = Wr.shape[1]
    T = Wt.shape[1]
    Cp, Rp = _round_up(C, 128), _round_up(R, 128)

    Wcr = jnp.zeros((D, Cp + Rp), compute_dtype)
    Wcr = Wcr.at[:, :C].set(Wc.astype(compute_dtype))
    Wcr = Wcr.at[:, Cp:Cp + R].set(Wr.astype(compute_dtype))
    bcr = jnp.zeros((1, Cp + Rp), jnp.float32)
    bcr = bcr.at[0, :C].set(bc.astype(jnp.float32))
    bcr = bcr.at[0, Cp:Cp + R].set(br.astype(jnp.float32))

    Wtc = Wt[:C, :].astype(compute_dtype)          # (C, T) — unpadded
    Wtr = Wt[C:, :].astype(compute_dtype)          # (R, T) — unpadded
    bt_p = bt.astype(jnp.float32).reshape(1, T)

    return {"Wcr": Wcr, "bcr": bcr, "Wtc": Wtc, "Wtr": Wtr, "bt": bt_p}


def _choose_tb(B: int, block_b: int) -> int:
    if B <= 128:
        return _round_up(max(B, 1), 8)
    # >= 2 grid steps so ("parallel",) shards the batch axis across both
    # TensorCores on v7x; tiles are multiples of 128 for MXU M-fill.
    n_steps = max(_cdiv(B, block_b), 2)
    return _round_up(_cdiv(B, n_steps), 128)


def concept_model_forward(x, packed, concepts=None, intervention_idxs=None,
                          *, block_b=512, compute_dtype=jnp.bfloat16):
    """ConceptModel forward. Returns (concept_logits, residual, target_logits).

    `packed` is the output of prepare_params (packing runs once, not per call).
    """
    Wcr, bcr = packed["Wcr"], packed["bcr"]
    Wtc, Wtr, bt_p = packed["Wtc"], packed["Wtr"], packed["bt"]

    B, D = x.shape
    C, T = Wtc.shape
    R = Wtr.shape[0]
    Cp = _round_up(C, 128)
    Rp = Wcr.shape[1] - Cp

    act_dtype = _sigmoid_dtype(compute_dtype)
    w_isize = jnp.dtype(compute_dtype).itemsize
    x_isize = jnp.dtype(x.dtype).itemsize

    TB = _choose_tb(B, block_b)
    Bp = _round_up(B, TB)
    grid = (Bp // TB,)

    # x stays in its HBM dtype (cast happens in-kernel); pad batch only if needed.
    x_p = x if Bp == B else jnp.pad(x, ((0, Bp - B), (0, 0)))

    with_iv = intervention_idxs is not None
    mask_dtype = compute_dtype  # exact for 0/1 masks and binary concepts
    # TODO(synk): keep concepts / intervention_idxs transfers in f32 if
    # fractional (non 0/1) intervention masks must be supported bit-exactly.

    args = [x_p]
    in_specs = [pl.BlockSpec((TB, D), lambda i: (i, 0))]
    if with_iv:
        c = concepts if concepts is not None else jnp.zeros((B, C), x.dtype)
        c_p = c.astype(mask_dtype)
        iv_p = intervention_idxs.astype(mask_dtype)
        if Bp != B:
            c_p = jnp.pad(c_p, ((0, Bp - B), (0, 0)))
            iv_p = jnp.pad(iv_p, ((0, Bp - B), (0, 0)))
        args += [c_p, iv_p]
        in_specs += [pl.BlockSpec((TB, C), lambda i: (i, 0)),
                     pl.BlockSpec((TB, C), lambda i: (i, 0))]

    args += [Wcr, bcr, Wtc, Wtr, bt_p]
    in_specs += [
        _resident_spec((D, Cp + Rp)),   # resident across grid steps, 1 buffer
        _resident_spec((1, Cp + Rp)),
        _resident_spec((C, T)),
        _resident_spec((R, T)),
        _resident_spec((1, T)),
    ]

    # Unpadded outputs (block last dim == full array dim): no 128-padded f32
    # writeback and no slice copies afterwards.
    out_shapes = (
        jax.ShapeDtypeStruct((Bp, C), jnp.float32),   # concept_logits
        jax.ShapeDtypeStruct((Bp, R), jnp.float32),   # residual
        jax.ShapeDtypeStruct((Bp, T), jnp.float32),   # target_logits
    )
    out_specs = (
        pl.BlockSpec((TB, C), lambda i: (i, 0)),
        pl.BlockSpec((TB, R), lambda i: (i, 0)),
        pl.BlockSpec((TB, T), lambda i: (i, 0)),
    )

    # ---- VMEM budget & cost estimate ----
    bytes_w = (D * (Cp + Rp) + C * T + R * T) * w_isize + ((Cp + Rp) + T) * 4
    bytes_io = TB * D * x_isize + TB * (C + R + T) * 4
    if with_iv:
        bytes_io += 2 * TB * C * jnp.dtype(mask_dtype).itemsize
    bytes_tmp = 4 * TB * (Cp + Rp) * 4          # in-kernel f32 temporaries (est.)

    vmem_cap = _vmem_budget_cap()
    if bytes_w > int(0.9 * vmem_cap):
        # TODO(synk): add a K-tiled fallback (second 'arbitrary' grid axis over D
        # with an f32 VMEM accumulator) for weights too large to stay resident.
        raise ValueError(
            f"Resident weights ({bytes_w/2**20:.1f} MiB) exceed the VMEM budget "
            f"({vmem_cap/2**20:.1f} MiB); K-tiling fallback not implemented.")
    vmem_est = bytes_w + 2 * bytes_io + bytes_tmp + (2 << 20)
    vmem_limit = int(min(max(vmem_est, 32 << 20), vmem_cap))

    flops = 2 * Bp * D * (Cp + Rp) + 2 * Bp * (C + R) * T
    bytes_accessed = (Bp * D * x_isize + bytes_w + Bp * (C + R + T) * 4
                      + (2 * Bp * C * jnp.dtype(mask_dtype).itemsize if with_iv else 0))
    cost = pl.CostEstimate(flops=int(flops),
                           transcendentals=int(Bp * C),
                           bytes_accessed=int(bytes_accessed))

    cl, res, tl = pl.pallas_call(
        _make_kernel(C, R, Cp, with_iv, compute_dtype, act_dtype),
        out_shape=out_shapes,
        grid=grid,
        in_specs=in_specs,
        out_specs=out_specs,
        compiler_params=pltpu.CompilerParams(
            dimension_semantics=("parallel",),
            vmem_limit_bytes=vmem_limit),
        cost_estimate=cost,
    )(*args)

    if Bp != B:
        cl, res, tl = cl[:B], res[:B], tl[:B]
    if T == 1:
        tl = tl[:, 0]
    return cl, res, tl


def init_params(key, D, C, R, T):
    ks = jax.random.split(key, 6)
    scale_in = 1.0 / jnp.sqrt(D)
    scale_bn = 1.0 / jnp.sqrt(C + R)
    return {
        "Wc": jax.random.uniform(ks[0], (D, C), jnp.float32, -scale_in, scale_in),
        "bc": jax.random.uniform(ks[1], (C,), jnp.float32, -scale_in, scale_in),
        "Wr": jax.random.uniform(ks[2], (D, R), jnp.float32, -scale_in, scale_in),
        "br": jax.random.uniform(ks[3], (R,), jnp.float32, -scale_in, scale_in),
        "Wt": jax.random.uniform(ks[4], (C + R, T), jnp.float32, -scale_bn, scale_bn),
        "bt": jax.random.uniform(ks[5], (T,), jnp.float32, -scale_bn, scale_bn),
    }


def reference_forward(x, params, concepts=None, intervention_idxs=None):
    cl = x @ params["Wc"] + params["bc"]
    res = x @ params["Wr"] + params["br"]
    cp = jax.nn.sigmoid(cl)
    if intervention_idxs is not None:
        c = concepts if concepts is not None else jnp.zeros_like(cp)
        cp = cp * (1.0 - intervention_idxs) + c * intervention_idxs
    tl = jnp.concatenate([cp, res], axis=-1) @ params["Wt"] + params["bt"]
    if tl.shape[-1] == 1:
        tl = tl[..., 0]
    return cl, res, tl


if __name__ == "__main__":
    B, D, C, R, T = 8, 32, 16, 16, 8  # batch, input dim, concepts, residual, classes

    key = jax.random.PRNGKey(0)
    kx, kp, kc, ki = jax.random.split(key, 4)
    x = jax.random.normal(kx, (B, D), jnp.float32)
    params = init_params(kp, D, C, R, T)

    # One-time weight packing (hoisted out of the hot path; cached arrays).
    packed = jax.block_until_ready(prepare_params(params))

    # bf16 MXU inputs -> compare against the f32 reference with a loose tolerance.
    TOL = 3e-2

    # ---- fast path: no concepts / no intervention ----
    fwd = jax.jit(concept_model_forward)
    cl, res, tl = jax.block_until_ready(fwd(x, packed))
    cl_ref, res_ref, tl_ref = reference_forward(x, params)
    assert cl.shape == (B, C) and res.shape == (B, R) and tl.shape == (B, T)
    assert jnp.allclose(cl, cl_ref, atol=TOL, rtol=TOL), "concept_logits mismatch"
    assert jnp.allclose(res, res_ref, atol=TOL, rtol=TOL), "residual mismatch"
    assert jnp.allclose(tl, tl_ref, atol=TOL, rtol=TOL), "target_logits mismatch"

    # ---- intervention path: ground-truth concepts mixed in where iv == 1 ----
    concepts = jax.random.bernoulli(kc, 0.5, (B, C)).astype(jnp.float32)
    iv = jax.random.bernoulli(ki, 0.5, (B, C)).astype(jnp.float32)
    fwd_iv = jax.jit(lambda x, p, c, m: concept_model_forward(x, p, c, m))
    cl2, res2, tl2 = jax.block_until_ready(fwd_iv(x, packed, concepts, iv))
    cl2_ref, res2_ref, tl2_ref = reference_forward(x, params, concepts, iv)
    assert jnp.allclose(cl2, cl2_ref, atol=TOL, rtol=TOL), "concept_logits (iv) mismatch"
    assert jnp.allclose(res2, res2_ref, atol=TOL, rtol=TOL), "residual (iv) mismatch"
    assert jnp.allclose(tl2, tl2_ref, atol=TOL, rtol=TOL), "target_logits (iv) mismatch"

    # TODO(synk): 'one_hot' concept_type uses gumbel_softmax(hard=True); only the
    # 'binary' (sigmoid) path is implemented here. Non-Identity base/bottleneck/
    # cross-attention/batch-norm submodules and checkpoint loading are likewise
    # out of scope for this kernel.
    print("KERNEL_OK")
</pallas_src>

<mosaic_0001>
module attributes {stable_mosaic.version = 11 : i64} {
  func.func @kernel(%arg0: i32, %arg1: memref<8x32xf32, #tpu.memory_space<vmem>>, %arg2: memref<32x256xbf16, #tpu.memory_space<vmem>>, %arg3: memref<1x256xf32, #tpu.memory_space<vmem>>, %arg4: memref<16x8xbf16, #tpu.memory_space<vmem>>, %arg5: memref<16x8xbf16, #tpu.memory_space<vmem>>, %arg6: memref<1x8xf32, #tpu.memory_space<vmem>>, %arg7: memref<8x16xf32, #tpu.memory_space<vmem>>, %arg8: memref<8x16xf32, #tpu.memory_space<vmem>>, %arg9: memref<8x8xf32, #tpu.memory_space<vmem>>) attributes {dimension_semantics = [#tpu.dimension_semantics<parallel>], iteration_bounds = array<i64: 1>, scalar_prefetch = 0 : i64, scratch_operands = 0 : i64, tpu.core_type = #tpu.core_type<tc>, window_params = [{transform_indices = @transform_0, window_bounds = array<i64: 8, 32>}, {pipeline_mode = #tpu.pipeline_mode<synchronous>, transform_indices = @transform_1, window_bounds = array<i64: 32, 256>}, {pipeline_mode = #tpu.pipeline_mode<synchronous>, transform_indices = @transform_2, window_bounds = array<i64: 1, 256>}, {pipeline_mode = #tpu.pipeline_mode<synchronous>, transform_indices = @transform_3, window_bounds = array<i64: 16, 8>}, {pipeline_mode = #tpu.pipeline_mode<synchronous>, transform_indices = @transform_4, window_bounds = array<i64: 16, 8>}, {pipeline_mode = #tpu.pipeline_mode<synchronous>, transform_indices = @transform_5, window_bounds = array<i64: 1, 8>}, {transform_indices = @transform_6, window_bounds = array<i64: 8, 16>}, {transform_indices = @transform_7, window_bounds = array<i64: 8, 16>}, {transform_indices = @transform_8, window_bounds = array<i64: 8, 8>}]} {
    %c0 = arith.constant 0 : index
    %c0_0 = arith.constant 0 : index
    %0 = vector.load %arg1[%c0, %c0_0] : memref<8x32xf32, #tpu.memory_space<vmem>>, vector<8x32xf32>
    %1 = arith.truncf %0 : vector<8x32xf32> to vector<8x32xbf16>
    %c0_1 = arith.constant 0 : index
    %c0_2 = arith.constant 0 : index
    %2 = vector.load %arg2[%c0_1, %c0_2] : memref<32x256xbf16, #tpu.memory_space<vmem>>, vector<32x256xbf16>
    %cst = arith.constant dense<0.000000e+00> : vector<8x256xf32>
    %3 = tpu.matmul %1, %2, %cst {dimension_numbers = #tpu.dot_dimension_numbers<[1], [0], [0], [1], [0, 0, 1, 1], [], []>} : vector<8x32xbf16>, vector<32x256xbf16>, vector<8x256xf32> -> vector<8x256xf32>
    %c0_3 = arith.constant 0 : index
    %c0_4 = arith.constant 0 : index
    %4 = vector.load %arg3[%c0_3, %c0_4] : memref<1x256xf32, #tpu.memory_space<vmem>>, vector<1x256xf32>
    %5 = vector.broadcast %4 : vector<1x256xf32> to vector<8x256xf32>
    %6 = arith.addf %3, %5 : vector<8x256xf32>
    %7 = vector.extract_strided_slice %6 {offsets = [0, 0], sizes = [8, 16], strides = [1, 1]} : vector<8x256xf32> to vector<8x16xf32>
    %8 = vector.extract_strided_slice %6 {offsets = [0, 128], sizes = [8, 16], strides = [1, 1]} : vector<8x256xf32> to vector<8x16xf32>
    %9 = arith.truncf %7 : vector<8x16xf32> to vector<8x16xbf16>
    %10 = arith.negf %9 : vector<8x16xbf16>
    %11 = math.exp %10 : vector<8x16xbf16>
    %cst_5 = arith.constant 1.000000e+00 : bf16
    %12 = vector.broadcast %cst_5 : bf16 to vector<8x16xbf16>
    %13 = arith.addf %12, %11 : vector<8x16xbf16>
    %14 = arith.divf %12, %13 : vector<8x16xbf16>
    %c0_6 = arith.constant 0 : index
    %c0_7 = arith.constant 0 : index
    %15 = vector.load %arg4[%c0_6, %c0_7] : memref<16x8xbf16, #tpu.memory_space<vmem>>, vector<16x8xbf16>
    %cst_8 = arith.constant dense<0.000000e+00> : vector<8x8xf32>
    %16 = tpu.matmul %14, %15, %cst_8 {dimension_numbers = #tpu.dot_dimension_numbers<[1], [0], [0], [1], [0, 0, 1, 1], [], []>} : vector<8x16xbf16>, vector<16x8xbf16>, vector<8x8xf32> -> vector<8x8xf32>
    %17 = arith.truncf %8 : vector<8x16xf32> to vector<8x16xbf16>
    %c0_9 = arith.constant 0 : index
    %c0_10 = arith.constant 0 : index
    %18 = vector.load %arg5[%c0_9, %c0_10] : memref<16x8xbf16, #tpu.memory_space<vmem>>, vector<16x8xbf16>
    %cst_11 = arith.constant dense<0.000000e+00> : vector<8x8xf32>
    %19 = tpu.matmul %17, %18, %cst_11 {dimension_numbers = #tpu.dot_dimension_numbers<[1], [0], [0], [1], [0, 0, 1, 1], [], []>} : vector<8x16xbf16>, vector<16x8xbf16>, vector<8x8xf32> -> vector<8x8xf32>
    %20 = arith.addf %16, %19 : vector<8x8xf32>
    %c0_12 = arith.constant 0 : index
    %c0_13 = arith.constant 0 : index
    %21 = vector.load %arg6[%c0_12, %c0_13] : memref<1x8xf32, #tpu.memory_space<vmem>>, vector<1x8xf32>
    %22 = vector.broadcast %21 : vector<1x8xf32> to vector<8x8xf32>
    %23 = arith.addf %20, %22 : vector<8x8xf32>
    %c0_14 = arith.constant 0 : index
    %c0_15 = arith.constant 0 : index
    %24 = vector.load %arg7[%c0_14, %c0_15] : memref<8x16xf32, #tpu.memory_space<vmem>>, vector<8x16xf32>
    tpu.vector_store %arg7[%c0_14, %c0_15], %7 {strides = array<i32>} : memref<8x16xf32, #tpu.memory_space<vmem>>, vector<8x16xf32>,
    %c0_16 = arith.constant 0 : index
    %c0_17 = arith.constant 0 : index
    %25 = vector.load %arg8[%c0_16, %c0_17] : memref<8x16xf32, #tpu.memory_space<vmem>>, vector<8x16xf32>
    tpu.vector_store %arg8[%c0_16, %c0_17], %8 {strides = array<i32>} : memref<8x16xf32, #tpu.memory_space<vmem>>, vector<8x16xf32>,
    %c0_18 = arith.constant 0 : index
    %c0_19 = arith.constant 0 : index
    %26 = vector.load %arg9[%c0_18, %c0_19] : memref<8x8xf32, #tpu.memory_space<vmem>>, vector<8x8xf32>
    tpu.vector_store %arg9[%c0_18, %c0_19], %23 {strides = array<i32>} : memref<8x8xf32, #tpu.memory_space<vmem>>, vector<8x8xf32>,
    return
  }
  func.func @transform_0(%arg0: i32) -> (i32, i32) {
    %c0_i32 = arith.constant 0 : i32
    %c0_i32_0 = arith.constant 0 : i32
    return %arg0, %c0_i32 : i32, i32
  }
  func.func @transform_1(%arg0: i32) -> (i32, i32) {
    %c0_i32 = arith.constant 0 : i32
    %c0_i32_0 = arith.constant 0 : i32
    %c0_i32_1 = arith.constant 0 : i32
    return %c0_i32, %c0_i32_0 : i32, i32
  }
  func.func @transform_2(%arg0: i32) -> (i32, i32) {
    %c0_i32 = arith.constant 0 : i32
    %c0_i32_0 = arith.constant 0 : i32
    %c0_i32_1 = arith.constant 0 : i32
    return %c0_i32, %c0_i32_0 : i32, i32
  }
  func.func @transform_3(%arg0: i32) -> (i32, i32) {
    %c0_i32 = arith.constant 0 : i32
    %c0_i32_0 = arith.constant 0 : i32
    %c0_i32_1 = arith.constant 0 : i32
    return %c0_i32, %c0_i32_0 : i32, i32
  }
  func.func @transform_4(%arg0: i32) -> (i32, i32) {
    %c0_i32 = arith.constant 0 : i32
    %c0_i32_0 = arith.constant 0 : i32
    %c0_i32_1 = arith.constant 0 : i32
    return %c0_i32, %c0_i32_0 : i32, i32
  }
  func.func @transform_5(%arg0: i32) -> (i32, i32) {
    %c0_i32 = arith.constant 0 : i32
    %c0_i32_0 = arith.constant 0 : i32
    %c0_i32_1 = arith.constant 0 : i32
    return %c0_i32, %c0_i32_0 : i32, i32
  }
  func.func @transform_6(%arg0: i32) -> (i32, i32) {
    %c0_i32 = arith.constant 0 : i32
    %c0_i32_0 = arith.constant 0 : i32
    return %arg0, %c0_i32 : i32, i32
  }
  func.func @transform_7(%arg0: i32) -> (i32, i32) {
    %c0_i32 = arith.constant 0 : i32
    %c0_i32_0 = arith.constant 0 : i32
    return %arg0, %c0_i32 : i32, i32
  }
  func.func @transform_8(%arg0: i32) -> (i32, i32) {
    %c0_i32 = arith.constant 0 : i32
    %c0_i32_0 = arith.constant 0 : i32
    return %arg0, %c0_i32 : i32, i32
  }
}

</mosaic_0001>

<llo_original>
// kernel: concept_model_forward.1
$region0: #{concept_model_forward.1}
  #allocation0 [shape = 'u32[]', space=smem, size = 0x4, offset = 0x4, fixed_abs, tag = 'smem constant byte address 0x4 - core index']
  #allocation1 [shape = 'u32[144,128]{1,0:T(1,128)}', space=vmem, size = 0x12000, scoped, tag = 'internal scratch']
  %s0 = inlined_call_operand.vmem [shape: f32[8,32], index: 0, kind: input, shape index: {}]
  %s1 = inlined_call_operand.hbm [shape: bf16[32,256], index: 1, kind: input, shape index: {}]
  %s2 = inlined_call_operand.vmem [shape: f32[1,256], index: 2, kind: input, shape index: {}]
  %s3 = inlined_call_operand.vmem [shape: bf16[16,8], index: 3, kind: input, shape index: {}]
  %s4 = inlined_call_operand.vmem [shape: bf16[16,8], index: 4, kind: input, shape index: {}]
  %s5 = inlined_call_operand.vmem [shape: f32[1,8], index: 5, kind: input, shape index: {}]
  %s6 = inlined_call_operand.hbm [shape: f32[8,16], index: 6, kind: output, shape index: {0}]
  %s7 = inlined_call_operand.hbm [shape: f32[8,16], index: 7, kind: output, shape index: {1}]
  %s8 = inlined_call_operand.hbm [shape: f32[8,8], index: 8, kind: output, shape index: {2}]
  %9 = xla_tuple %s6, %s7, %s8
  %s10 = sld [smem:[#allocation0]]
  $region54: #{concept_model_forward.1} parent=0
    _
  %s12 = ssub.s32 1, %s10
  %s13 = scalar_select 0, %s12, %s10
  $region1: #{concept_model_forward.1} parent=0
    #allocation2 [shape = 'u8[16384]{0}', space=vmem, size = 0x4000, scoped, tag = 'input window, operand 1, single buffered']
    #allocation3 [shape = 's32[1]{0}', space=sflag, size = 0x4, scoped, tag = 'scoped memory for concept_model_forward.1']
    #allocation4 [shape = 's32[1]{0}', space=sflag, size = 0x4, scoped, tag = 'scoped memory for concept_model_forward.1']
    #allocation5 [shape = 'u8[4096]{0}', space=vmem, size = 0x1000, scoped, tag = 'output window, operand 0, single buffered']
    #allocation6 [shape = 'u8[4096]{0}', space=vmem, size = 0x1000, scoped, tag = 'output window, operand 1, single buffered']
    #allocation7 [shape = 's32[1]{0}', space=sflag, size = 0x4, scoped, tag = 'scoped memory for concept_model_forward.1']
    #allocation8 [shape = 'u8[4096]{0}', space=vmem, size = 0x1000, scoped, tag = 'output window, operand 2, single buffered']
    %14 = vsyncpa [#allocation3], 0
    %15 = vsyncpa [#allocation4], 0
    %16 = vsyncpa [#allocation7], 0
    // Predicated region
    $region2: #{concept_model_forward.1} parent=1 // pred_check
      _
    $region3: #{concept_model_forward.1} parent=1 // pred_check_branch
      %18 = sbr.rel (0) target = $region5
    $region4: #{concept_model_forward.1} parent=1 // pred_region
      _
    $region5: #{concept_model_forward.1} parent=1 // pred_fallthru
      _
    // Predicated region
    $region6: #{concept_model_forward.1} parent=1 // pred_check
      _
    $region7: #{concept_model_forward.1} parent=1 // pred_check_branch
      %20 = sbr.rel (0) target = $region9
    $region8: #{concept_model_forward.1} parent=1 // pred_region
      %s22 = ssub.s32 512, 512
      %23 = vsyncadd [#allocation3], %s22
      %s24 = sshll.u32 [#allocation2], 4
      %s25 = int_to_ptr.vmem [resolvable:$true] %s24
      %30 = dma.hbm_to_vmem [thread:$0]  %s1, 512, %s25, [#allocation3], 128, 128, 8
    $region9: #{concept_model_forward.1} parent=1 // pred_fallthru
      _
    // Predicated region
    $region10: #{concept_model_forward.1} parent=1 // pred_check
      _
    $region11: #{concept_model_forward.1} parent=1 // pred_check_branch
      %32 = sbr.rel (0) target = $region13
    $region12: #{concept_model_forward.1} parent=1 // pred_region
      _
    $region13: #{concept_model_forward.1} parent=1 // pred_fallthru
      _
    // Predicated region
    $region14: #{concept_model_forward.1} parent=1 // pred_check
      _
    $region15: #{concept_model_forward.1} parent=1 // pred_check_branch
      %34 = sbr.rel (0) target = $region17
    $region16: #{concept_model_forward.1} parent=1 // pred_region
      _
    $region17: #{concept_model_forward.1} parent=1 // pred_fallthru
      _
    // Predicated region
    $region18: #{concept_model_forward.1} parent=1 // pred_check
      _
    $region19: #{concept_model_forward.1} parent=1 // pred_check_branch
      %36 = sbr.rel (0) target = $region21
    $region20: #{concept_model_forward.1} parent=1 // pred_region
      _
    $region21: #{concept_model_forward.1} parent=1 // pred_fallthru
      _
    // Predicated region
    $region22: #{concept_model_forward.1} parent=1 // pred_check
      _
    $region23: #{concept_model_forward.1} parent=1 // pred_check_branch
      %38 = sbr.rel (0) target = $region25
    $region24: #{concept_model_forward.1} parent=1 // pred_region
      _
    $region25: #{concept_model_forward.1} parent=1 // pred_fallthru
      _
    // Predicated region
    $region26: #{concept_model_forward.1} parent=1 // pred_check
      _
    $region27: #{concept_model_forward.1} parent=1 // pred_check_branch
      %40 = sbr.rel (0) target = $region29
    $region28: #{concept_model_forward.1} parent=1 // pred_region
      %41 = dma.done [#allocation3], 512
    $region29: #{concept_model_forward.1} parent=1 // pred_fallthru
      _
    %v44 = vld [vmem:[%s0] sm:$0xff]
    %v45 = vpack.c.bf16 %v44, %v44
    %v46 = vld [vmem:[#allocation2] sm:$0xff]
    %v47 = vld [vmem:[#allocation2 + $0x8] sm:$0xff]
    %v48 = vld [vmem:[#allocation2 + $0x10] sm:$0xff]
    %v49 = vld [vmem:[#allocation2 + $0x18] sm:$0xff]
    %v50 = vld [vmem:[%s2] sm:$0x3]
    %v52 = vlaneseq
    %v53 = vshrl.u32 %v52, 7
    %v54 = vsub.s32 0, %v53
    %v55 = vrot.slane %v50, %v54
    %v56 = vlaneseq
    %v57 = vshrl.u32 %v56, 7
    %v58 = vsub.s32 1, %v57
    %v59 = vrot.slane %v50, %v58
    %v66 = vunpack.c.l.b16 %v46
    %v67 = vunpack.c.h.b16 %v46
    %v68 = vunpack.c.l.b16 %v47
    %v69 = vunpack.c.h.b16 %v47
    %v70 = vunpack.c.l.b16 %v48
    %v71 = vunpack.c.h.b16 %v48
    %v72 = vunpack.c.l.b16 %v49
    %v73 = vunpack.c.h.b16 %v49
    %v74 = vpack.c.b16 %v68, %v66
    %v75 = vpack.c.b16 %v69, %v67
    %v76 = vpack.c.b16 %v72, %v70
    %v77 = vpack.c.b16 %v73, %v71
    %vm82 = vcmask 261120
    %v84 = vsel %vm82, %v45, 0
    %86 = vmatprep.subr.bf16.mxu0 %v75
    %87 = vmatpush1.bf16.msra.mxu0 %v74
    %88 = vmatprep.subr.bf16.mxu0 %v77
    %89 = vmatpush1.bf16.msra.mxu0 %v76
    %90 = vmatprep.subr.bf16.mxu0 0
    %91 = vmatpush1.bf16.msra.mxu0 0
    %92 = vmatprep.subr.bf16.mxu0 0
    %93 = vmatpush1.bf16.msra.mxu0 0
    %94 = vmatprep.subr.bf16.mxu0 0
    %95 = vmatpush1.bf16.msra.mxu0 0
    %96 = vmatprep.subr.bf16.mxu0 0
    %97 = vmatpush1.bf16.msra.mxu0 0
    %98 = vmatprep.subr.bf16.mxu0 0
    %99 = vmatpush1.bf16.msra.mxu0 0
    %100 = vmatprep.subr.bf16.mxu0 0
    %101 = vmatpush1.bf16.msra.mxu0 0
    %102 = vmatprep.subr.bf16.mxu0 0
    %103 = vmatpush1.bf16.msra.mxu0 0
    %104 = vmatprep.subr.bf16.mxu0 0
    %105 = vmatpush1.bf16.msra.mxu0 0
    %106 = vmatprep.subr.bf16.mxu0 0
    %107 = vmatpush1.bf16.msra.mxu0 0
    %108 = vmatprep.subr.bf16.mxu0 0
    %109 = vmatpush1.bf16.msra.mxu0 0
    %110 = vmatprep.subr.bf16.mxu0 0
    %111 = vmatpush1.bf16.msra.mxu0 0
    %112 = vmatprep.subr.bf16.mxu0 0
    %113 = vmatpush1.bf16.msra.mxu0 0
    %114 = vmatprep.subr.bf16.mxu0 0
    %115 = vmatpush1.bf16.msra.mxu0 0
    %116 = vmatprep.subr.bf16.mxu0 0
    %117 = vmatpush1.bf16.msra.mxu0 0
    %118 = vmatprep.mubr.bf16.mxu0 0
    %119 = vmatmul.mubr.bf16.gmra.mrb[0].mxu0 %v84
    %v120 = vpop.f32.mrb[0].mxu0
    %v121 = vadd.f32 %v55, %v120
    %v122 = vpop.f32.mrb[0].mxu0
    %v123 = vadd.f32 %v59, %v122
    %v124 = vpop.f32.mrb[0].mxu0
    %v125 = vpop.f32.mrb[0].mxu0
    %126 = vdwg.mxu0
    %v127 = vpack.c.bf16 %v121, %v121
    %v128 = vxor.u32 %v127, 2147516416
    %v130 = vmul.bf16 %v128, 1069105081
    %v131 = vpow.bf16.pop %v130
    %v132 = vadd.bf16 %v131, 1065369472
    %v133 = vrcp.bf16.pop %v132
    %v134 = vmul.bf16 1065369472, %v133
    %v135 = vld [vmem:[%s3] sm:$0xf]
    %v136 = vld [vmem:[%s3 + $0x4] sm:$0xf]
    %v137 = vpack.c.bf16 %v123, %v123
    %v138 = vld [vmem:[%s4] sm:$0xf]
    %v139 = vld [vmem:[%s4 + $0x4] sm:$0xf]
    %v142 = vunpack.c.l.b16 %v138
    %v143 = vunpack.c.l.b16 %v139
    %v144 = vpack.c.b16 %v143, %v142
    %vm146 = vcmask 130048
    %v148 = vsel %vm146, %v137, 0
    %150 = vmatprep.subr.bf16.mxu0 0
    %151 = vmatpush1.bf16.msra.mxu0 %v144
    %152 = vmatprep.subr.bf16.mxu0 0
    %153 = vmatpush1.bf16.msra.mxu0 0
    %154 = vmatprep.subr.bf16.mxu0 0
    %155 = vmatpush1.bf16.msra.mxu0 0
    %156 = vmatprep.subr.bf16.mxu0 0
    %157 = vmatpush1.bf16.msra.mxu0 0
    %158 = vmatprep.subr.bf16.mxu0 0
    %159 = vmatpush1.bf16.msra.mxu0 0
    %160 = vmatprep.subr.bf16.mxu0 0
    %161 = vmatpush1.bf16.msra.mxu0 0
    %162 = vmatprep.subr.bf16.mxu0 0
    %163 = vmatpush1.bf16.msra.mxu0 0
    %164 = vmatprep.subr.bf16.mxu0 0
    %165 = vmatpush1.bf16.msra.mxu0 0
    %166 = vmatprep.subr.bf16.mxu0 0
    %167 = vmatpush1.bf16.msra.mxu0 0
    %168 = vmatprep.subr.bf16.mxu0 0
    %169 = vmatpush1.bf16.msra.mxu0 0
    %170 = vmatprep.subr.bf16.mxu0 0
    %171 = vmatpush1.bf16.msra.mxu0 0
    %172 = vmatprep.subr.bf16.mxu0 0
    %173 = vmatpush1.bf16.msra.mxu0 0
    %174 = vmatprep.subr.bf16.mxu0 0
    %175 = vmatpush1.bf16.msra.mxu0 0
    %176 = vmatprep.subr.bf16.mxu0 0
    %177 = vmatpush1.bf16.msra.mxu0 0
    %178 = vmatprep.subr.bf16.mxu0 0
    %179 = vmatpush1.bf16.msra.mxu0 0
    %180 = vmatprep.subr.bf16.mxu0 0
    %181 = vmatpush1.bf16.msra.mxu0 0
    %182 = vmatprep.mubr.bf16.mxu0 0
    %183 = vmatmul.mubr.bf16.gmra.mrb[0].mxu0 %v148
    %v184 = vpop.f32.mrb[0].mxu0
    %v185 = vadd.f32 0.0, %v184
    %v186 = vpop.f32.mrb[0].mxu0
    %v187 = vpop.f32.mrb[0].mxu0
    %v188 = vpop.f32.mrb[0].mxu0
    %189 = vdwg.mxu0
    %v192 = vunpack.c.l.b16 %v135
    %v193 = vunpack.c.l.b16 %v136
    %v194 = vpack.c.b16 %v193, %v192
    %v197 = vsel %vm146, %v134, 0
    %199 = vmatprep.subr.bf16.mxu0 0
    %200 = vmatpush1.bf16.msra.mxu0 %v194
    %201 = vmatprep.subr.bf16.mxu0 0
    %202 = vmatpush1.bf16.msra.mxu0 0
    %203 = vmatprep.subr.bf16.mxu0 0
    %204 = vmatpush1.bf16.msra.mxu0 0
    %205 = vmatprep.subr.bf16.mxu0 0
    %206 = vmatpush1.bf16.msra.mxu0 0
    %207 = vmatprep.subr.bf16.mxu0 0
    %208 = vmatpush1.bf16.msra.mxu0 0
    %209 = vmatprep.subr.bf16.mxu0 0
    %210 = vmatpush1.bf16.msra.mxu0 0
    %211 = vmatprep.subr.bf16.mxu0 0
    %212 = vmatpush1.bf16.msra.mxu0 0
    %213 = vmatprep.subr.bf16.mxu0 0
    %214 = vmatpush1.bf16.msra.mxu0 0
    %215 = vmatprep.subr.bf16.mxu0 0
    %216 = vmatpush1.bf16.msra.mxu0 0
    %217 = vmatprep.subr.bf16.mxu0 0
    %218 = vmatpush1.bf16.msra.mxu0 0
    %219 = vmatprep.subr.bf16.mxu0 0
    %220 = vmatpush1.bf16.msra.mxu0 0
    %221 = vmatprep.subr.bf16.mxu0 0
    %222 = vmatpush1.bf16.msra.mxu0 0
    %223 = vmatprep.subr.bf16.mxu0 0
    %224 = vmatpush1.bf16.msra.mxu0 0
    %225 = vmatprep.subr.bf16.mxu0 0
    %226 = vmatpush1.bf16.msra.mxu0 0
    %227 = vmatprep.subr.bf16.mxu0 0
    %228 = vmatpush1.bf16.msra.mxu0 0
    %229 = vmatprep.subr.bf16.mxu0 0
    %230 = vmatpush1.bf16.msra.mxu0 0
    %231 = vmatprep.mubr.bf16.mxu0 0
    %232 = vmatmul.mubr.bf16.gmra.mrb[0].mxu0 %v197
    %v233 = vpop.f32.mrb[0].mxu0
    %v234 = vadd.f32 %v185, %v233
    %v235 = vpop.f32.mrb[0].mxu0
    %v236 = vpop.f32.mrb[0].mxu0
    %v237 = vpop.f32.mrb[0].mxu0
    %238 = vdwg.mxu0
    %v239 = vld [vmem:[%s5] sm:$0x1]
    %v241 = vlaneseq
    %v242 = vshrl.u32 %v241, 7
    %v243 = vsub.s32 0, %v242
    %v244 = vrot.slane %v239, %v243
    %v246 = vadd.f32 %v234, %v244
    %247 = vst.msk [vmem:[#allocation5] sm:$0xff] %vm146, %v121
    %248 = vst.msk [vmem:[#allocation6] sm:$0xff] %vm146, %v123
    %vm249 = vcmask 64512
    %250 = vst.msk [vmem:[#allocation8] sm:$0xff] %vm249, %v246
    // Predicated region
    $region30: #{concept_model_forward.1} parent=1 // pred_check
      _
    $region31: #{concept_model_forward.1} parent=1 // pred_check_branch
      %252 = sbr.rel (0) target = $region33
    $region32: #{concept_model_forward.1} parent=1 // pred_region
      %s254 = ssub.s32 128, 128
      %255 = vsyncadd [#allocation4], %s254
      %s257 = sshll.u32 [#allocation5], 4
      %s258 = int_to_ptr.vmem [resolvable:$true] %s257
      %260 = dma.vmem_to_hbm [thread:$0]  %s258, 128, %s6, [#allocation4]
    $region33: #{concept_model_forward.1} parent=1 // pred_fallthru
      _
    // Predicated region
    $region34: #{concept_model_forward.1} parent=1 // pred_check
      _
    $region35: #{concept_model_forward.1} parent=1 // pred_check_branch
      %262 = sbr.rel (0) target = $region37
    $region36: #{concept_model_forward.1} parent=1 // pred_region
      %s264 = ssub.s32 128, 128
      %265 = vsyncadd [#allocation7], %s264
      %s267 = sshll.u32 [#allocation6], 4
      %s268 = int_to_ptr.vmem [resolvable:$true] %s267
      %270 = dma.vmem_to_hbm [thread:$0]  %s268, 128, %s7, [#allocation7]
    $region37: #{concept_model_forward.1} parent=1 // pred_fallthru
      _
    // Predicated region
    $region38: #{concept_model_forward.1} parent=1 // pred_check
      _
    $region39: #{concept_model_forward.1} parent=1 // pred_check_branch
      %272 = sbr.rel (0) target = $region41
    $region40: #{concept_model_forward.1} parent=1 // pred_region
      %s274 = ssub.s32 128, 128
      %275 = vsyncadd [#allocation7], %s274
      %s277 = sshll.u32 [#allocation8], 4
      %s278 = int_to_ptr.vmem [resolvable:$true] %s277
      %280 = dma.vmem_to_hbm [thread:$0]  %s278, 128, %s8, [#allocation7]
    $region41: #{concept_model_forward.1} parent=1 // pred_fallthru
      _
    // Predicated region
    $region42: #{concept_model_forward.1} parent=1 // pred_check
      _
    $region43: #{concept_model_forward.1} parent=1 // pred_check_branch
      %282 = sbr.rel (0) target = $region45
    $region44: #{concept_model_forward.1} parent=1 // pred_region
      %283 = dma.done [#allocation4], 128
    $region45: #{concept_model_forward.1} parent=1 // pred_fallthru
      _
    // Predicated region
    $region46: #{concept_model_forward.1} parent=1 // pred_check
      _
    $region47: #{concept_model_forward.1} parent=1 // pred_check_branch
      %285 = sbr.rel (0) target = $region49
    $region48: #{concept_model_forward.1} parent=1 // pred_region
      %286 = dma.done [#allocation7], 128
    $region49: #{concept_model_forward.1} parent=1 // pred_fallthru
      _
    // Predicated region
    $region50: #{concept_model_forward.1} parent=1 // pred_check
      _
    $region51: #{concept_model_forward.1} parent=1 // pred_check_branch
      %288 = sbr.rel (0) target = $region53
    $region52: #{concept_model_forward.1} parent=1 // pred_region
      %289 = dma.done [#allocation7], 128
    $region53: #{concept_model_forward.1} parent=1 // pred_fallthru
      _
    %290 = vsyncpa [#allocation3], 1
    %291 = vsyncpa [#allocation4], 1
    %292 = vsyncpa [#allocation7], 1

</llo_original>
